<compile_context>
chip_gen: v7x
topology: tpu7x:2x2x1
jax: 0.10.0
libtpu: 0.0.40
codegen_flags: <defaults>
</compile_context>

<pallas_src>
import functools

import jax
import jax.numpy as jnp
from jax.experimental import pallas as pl
from jax.experimental.pallas import tpu as pltpu


def _copy_kernel(x_ref, o_ref):
    # Straight tile copy: identical in/out blocks, no in-kernel slicing.
    o_ref[...] = x_ref[...]


def _slice_copy_kernel(x_ref, o_ref, *, l_out):
    # Small-l_out fallback: copy the first l_out columns of this row block.
    o_ref[...] = x_ref[:, :l_out]


def _row_tile(num_rows, row_width_elems, itemsize):
    """Pick a row (sublane) tile: ~2 MiB per buffer, aligned or full-dim."""
    sub = max(8, 32 // max(1, itemsize))                 # f32: 8, bf16: 16, int8: 32
    target = (2 * 1024 * 1024) // max(1, row_width_elems * itemsize)
    target = max(target, sub)
    if num_rows <= target:
        return num_rows                                  # full dim: always a legal block dim
    return max(sub, (target // sub) * sub)               # aligned tile < num_rows


def chomp1d(x: jax.Array, chomp_size: int) -> jax.Array:
    """Pallas equivalent of Chomp1d.forward: x[:, :, :-chomp_size]."""
    # NOTE: chomp_size == 0 (empty result in PyTorch, x[..., :-0]) is not supported.
    assert chomp_size > 0, "chomp_size must be positive"
    n, c, l = x.shape
    l_out = l - chomp_size
    assert l_out > 0, "chomp_size must be smaller than the sequence length"

    rows = n * c
    x2 = x.reshape(rows, l)                              # free row-major view
    itemsize = jnp.dtype(x.dtype).itemsize

    if l_out >= 128:
        # ---- fast path: lane-dense tiles, identical in/out BlockSpecs -------
        tl = min((l_out // 128) * 128, 2048)             # multiple of 128, <= l_out <= l
        tr = _row_tile(rows, tl, itemsize)
        grid = (pl.cdiv(rows, tr), pl.cdiv(l_out, tl))
        block = pl.BlockSpec((tr, tl), lambda r, li: (r, li))
        out2 = pl.pallas_call(
            _copy_kernel,
            out_shape=jax.ShapeDtypeStruct((rows, l_out), x.dtype),
            grid=grid,
            in_specs=[block],
            out_specs=block,
            compiler_params=pltpu.CompilerParams(
                dimension_semantics=("parallel", "parallel")),
        )(x2)
    else:
        # ---- fallback: l_out < 128 -> whole (small) rows per block ----------
        tr = _row_tile(rows, l, itemsize)
        grid = (pl.cdiv(rows, tr),)
        out2 = pl.pallas_call(
            functools.partial(_slice_copy_kernel, l_out=l_out),
            out_shape=jax.ShapeDtypeStruct((rows, l_out), x.dtype),
            grid=grid,
            in_specs=[pl.BlockSpec((tr, l), lambda r: (r, 0))],
            out_specs=pl.BlockSpec((tr, l_out), lambda r: (r, 0)),
            compiler_params=pltpu.CompilerParams(
                dimension_semantics=("parallel",)),
        )(x2)

    return out2.reshape(n, c, l_out)


if __name__ == "__main__":
    key = jax.random.PRNGKey(0)
    key_a, key_b = jax.random.split(key)

    # Case 1: small TCN-like shape -> fallback path (l_out < 128).
    N, C, L, chomp = 2, 4, 16, 3
    x = jax.random.normal(key_a, (N, C, L), dtype=jnp.float32)
    y = jax.block_until_ready(chomp1d(x, chomp))
    y_ref = x[:, :, :-chomp]
    assert y.shape == (N, C, L - chomp)
    assert y.dtype == x.dtype
    assert jnp.array_equal(y, y_ref)

    # Case 2: longer sequence -> tiled lane-dense fast path, including a
    # partial last lane tile (l_out = 295 -> tl = 256, 2 lane tiles).
    N2, C2, L2, chomp2 = 2, 4, 300, 5
    x2 = jax.random.normal(key_b, (N2, C2, L2), dtype=jnp.float32)
    y2 = jax.block_until_ready(chomp1d(x2, chomp2))
    assert y2.shape == (N2, C2, L2 - chomp2)
    assert jnp.array_equal(y2, x2[:, :, :-chomp2])

    print("KERNEL_OK")
</pallas_src>

<mosaic_0001>
module attributes {stable_mosaic.version = 11 : i64} {
  func.func @_slice_copy_kernel(%arg0: i32, %arg1: memref<8x16xf32, #tpu.memory_space<vmem>>, %arg2: memref<8x13xf32, #tpu.memory_space<vmem>>) attributes {dimension_semantics = [#tpu.dimension_semantics<parallel>], iteration_bounds = array<i64: 1>, scalar_prefetch = 0 : i64, scratch_operands = 0 : i64, tpu.core_type = #tpu.core_type<tc>, window_params = [{transform_indices = @transform_0, window_bounds = array<i64: 8, 16>}, {transform_indices = @transform_1, window_bounds = array<i64: 8, 13>}]} {
    %c0 = arith.constant 0 : index
    %c0_0 = arith.constant 0 : index
    %0 = vector.load %arg1[%c0, %c0_0] : memref<8x16xf32, #tpu.memory_space<vmem>>, vector<8x13xf32>
    %c0_1 = arith.constant 0 : index
    %c0_2 = arith.constant 0 : index
    %1 = vector.load %arg2[%c0_1, %c0_2] : memref<8x13xf32, #tpu.memory_space<vmem>>, vector<8x13xf32>
    tpu.vector_store %arg2[%c0_1, %c0_2], %0 {strides = array<i32>} : memref<8x13xf32, #tpu.memory_space<vmem>>, vector<8x13xf32>,
    return
  }
  func.func @transform_0(%arg0: i32) -> (i32, i32) {
    %c0_i32 = arith.constant 0 : i32
    %c0_i32_0 = arith.constant 0 : i32
    return %arg0, %c0_i32 : i32, i32
  }
  func.func @transform_1(%arg0: i32) -> (i32, i32) {
    %c0_i32 = arith.constant 0 : i32
    %c0_i32_0 = arith.constant 0 : i32
    return %arg0, %c0_i32 : i32, i32
  }
}

</mosaic_0001>

<llo_original>
// kernel: tpu_custom_call.1
$region0: #{tpu_custom_call.1}
  #allocation0 [shape = 'u32[]', space=smem, size = 0x4, offset = 0x4, fixed_abs, tag = 'smem constant byte address 0x4 - core index']
  #allocation1 [shape = 'u32[144,128]{1,0:T(1,128)}', space=vmem, size = 0x12000, scoped, tag = 'internal scratch']
  %s0 = inlined_call_operand.hbm [shape: f32[8,16], index: 0, kind: input, shape index: {}]
  %s1 = inlined_call_operand.hbm [shape: f32[8,13], index: 1, kind: output, shape index: {}]
  %s2 = sld [smem:[#allocation0]]
  $region18: #{tpu_custom_call.1} parent=0
    _
  %s4 = ssub.s32 1, %s2
  %s5 = scalar_select 0, %s4, %s2
  $region1: #{tpu_custom_call.1} parent=0
    #allocation2 [shape = 'u8[4096]{0}', space=vmem, size = 0x1000, scoped, tag = 'input window, operand 0, single buffered']
    #allocation3 [shape = 's32[1]{0}', space=sflag, size = 0x4, scoped, tag = 'scoped memory for tpu_custom_call.1']
    #allocation4 [shape = 's32[1]{0}', space=sflag, size = 0x4, scoped, tag = 'scoped memory for tpu_custom_call.1']
    #allocation5 [shape = 'u8[4096]{0}', space=vmem, size = 0x1000, scoped, tag = 'output window, operand 0, single buffered']
    %6 = vsyncpa [#allocation3], 0
    %7 = vsyncpa [#allocation4], 0
    // Predicated region
    $region2: #{tpu_custom_call.1} parent=1 // pred_check
      _
    $region3: #{tpu_custom_call.1} parent=1 // pred_check_branch
      %9 = sbr.rel (0) target = $region5
    $region4: #{tpu_custom_call.1} parent=1 // pred_region
      %s11 = ssub.s32 128, 128
      %12 = vsyncadd [#allocation3], %s11
      %s14 = sshll.u32 [#allocation2], 4
      %s15 = int_to_ptr.vmem [resolvable:$true] %s14
      %17 = dma.hbm_to_vmem [thread:$0]  %s0, 128, %s15, [#allocation3]
    $region5: #{tpu_custom_call.1} parent=1 // pred_fallthru
      _
    // Predicated region
    $region6: #{tpu_custom_call.1} parent=1 // pred_check
      _
    $region7: #{tpu_custom_call.1} parent=1 // pred_check_branch
      %19 = sbr.rel (0) target = $region9
    $region8: #{tpu_custom_call.1} parent=1 // pred_region
      %20 = dma.done [#allocation3], 128
    $region9: #{tpu_custom_call.1} parent=1 // pred_fallthru
      _
    %v21 = vld [vmem:[#allocation2] sm:$0xff]
    %vm22 = vcmask 105472
    %23 = vst.msk [vmem:[#allocation5] sm:$0xff] %vm22, %v21
    // Predicated region
    $region10: #{tpu_custom_call.1} parent=1 // pred_check
      _
    $region11: #{tpu_custom_call.1} parent=1 // pred_check_branch
      %25 = sbr.rel (0) target = $region13
    $region12: #{tpu_custom_call.1} parent=1 // pred_region
      %s27 = ssub.s32 128, 128
      %28 = vsyncadd [#allocation4], %s27
      %s30 = sshll.u32 [#allocation5], 4
      %s31 = int_to_ptr.vmem [resolvable:$true] %s30
      %33 = dma.vmem_to_hbm [thread:$0]  %s31, 128, %s1, [#allocation4]
    $region13: #{tpu_custom_call.1} parent=1 // pred_fallthru
      _
    // Predicated region
    $region14: #{tpu_custom_call.1} parent=1 // pred_check
      _
    $region15: #{tpu_custom_call.1} parent=1 // pred_check_branch
      %35 = sbr.rel (0) target = $region17
    $region16: #{tpu_custom_call.1} parent=1 // pred_region
      %36 = dma.done [#allocation4], 128
    $region17: #{tpu_custom_call.1} parent=1 // pred_fallthru
      _
    %37 = vsyncpa [#allocation3], 1
    %38 = vsyncpa [#allocation4], 1

</llo_original>
